<compile_context>
chip_gen: v7x
topology: tpu7x:2x2x1
jax: 0.10.0
libtpu: 0.0.40
codegen_flags: <defaults>
</compile_context>

<pallas_src>
import jax
import jax.numpy as jnp
from jax.experimental import pallas as pl
from jax.experimental.pallas import tpu as pltpu


# ----------------------------------------------------------------------------
# Kernel: one M-tile of   y = relu(x @ W1ᵀ + b1) @ W2ᵀ + b2
# ----------------------------------------------------------------------------
def _fused_mlp_kernel(x_ref, w1_ref, b1_ref, w2_ref, b2_ref, o_ref):
    # Cast activations to the weight dtype (bf16) in-kernel: VPU cast, no
    # extra HBM traffic.  Both dots accumulate in f32 on the MXU.
    x = x_ref[...].astype(w1_ref.dtype)                               # (tm, K)
    h = jnp.dot(x, w1_ref[...], preferred_element_type=jnp.float32)   # MXU
    h = jnp.maximum(h + b1_ref[...], 0.0)                             # bias + ReLU (VPU)
    h = h.astype(w2_ref.dtype)
    y = jnp.dot(h, w2_ref[...], preferred_element_type=jnp.float32)   # MXU
    o_ref[...] = (y + b2_ref[...]).astype(o_ref.dtype)                # (tm, N)


# ----------------------------------------------------------------------------
# Tiling / VMEM helpers
# ----------------------------------------------------------------------------
def _vmem_budget_bytes():
    """Generation-aware VMEM budget (half of physical: 32 MiB on v7x,
    64 MiB on v5e/v6e), with a conservative fallback if the query fails."""
    try:
        cap = int(getattr(pltpu.get_tpu_info(), "vmem_capacity_bytes",
                          64 * 1024 * 1024))
    except Exception:
        cap = 64 * 1024 * 1024
    return max(16 * 1024 * 1024, cap // 2)


def _pick_tile_m(M, K, N, weight_bytes, budget_bytes):
    """Pick the M tile size.

    Constraints (in priority order):
      1. fits the VMEM budget with double-buffered x / out rows + resident weights
      2. at least 2 grid tiles when M >= 16 (megacore sharding + pipelining)
      3. divides M exactly when feasible (no pad copy of x)
      4. multiple of 8 (sublane alignment)
    """
    fixed = weight_bytes + 2 * (K + N) * 4                 # resident weights + biases
    per_row = 2 * (K * 4 + N * 4)                          # 2x double-buffered in + out rows (f32 upper bound)
    cap = (budget_bytes - fixed) // max(per_row, 1)
    cap = int(min(cap, 2048, M))                           # big tiles amortize per-step overhead
    if M >= 16:
        cap = min(cap, max(8, ((M // 2) // 8) * 8))        # >= 2 tiles -> both TCs on v7x
    cap = max(8, (cap // 8) * 8)
    if M % 8 == 0:
        tm = cap
        while tm > 8 and M % tm != 0:                      # prefer a divisor of M (no pad)
            tm -= 8
        if M % tm == 0:
            return tm
    return cap                                             # ragged M -> fallback (pad)


# ----------------------------------------------------------------------------
# Forward wrapper
# ----------------------------------------------------------------------------
def fc_forward(x, params):
    """x: (..., K) -> (..., N).  Implements fc2(relu(fc1(x)))."""
    K = x.shape[-1]
    w1t, b1 = params["w1t"], params["b1"]                  # (K, K) bf16, (1, K) f32
    w2t, b2 = params["w2t"], params["b2"]                  # (K, N) bf16, (1, N) f32
    N = w2t.shape[1]
    out_dtype = x.dtype                                    # match torch: output dtype == input dtype

    x2 = x.reshape(-1, K)
    M = x2.shape[0]

    weight_bytes = w1t.size * w1t.dtype.itemsize + w2t.size * w2t.dtype.itemsize
    budget = _vmem_budget_bytes()
    tm = _pick_tile_m(M, K, N, weight_bytes, budget)
    n_tiles = pl.cdiv(M, tm)
    Mp = n_tiles * tm
    if Mp != M:
        # TODO(synk): ragged last tile handled by a pad copy; only hit when M
        # has no sublane-aligned divisor within the VMEM cap.
        x2 = jnp.pad(x2, ((0, Mp - M), (0, 0)))

    x_itm = x2.dtype.itemsize
    out_itm = jnp.dtype(out_dtype).itemsize
    vmem_est = (weight_bytes + 2 * (K + N) * 4
                + 2 * tm * K * x_itm + 2 * tm * N * out_itm)
    vmem_limit = int(min(max(2 * vmem_est, 16 * 1024 * 1024), budget))

    cost = pl.CostEstimate(
        flops=2 * M * K * K + 2 * M * K * N,
        transcendentals=0,
        bytes_accessed=(x2.size * x_itm + weight_bytes + (K + N) * 4
                        + Mp * N * out_itm),
    )

    out = pl.pallas_call(
        _fused_mlp_kernel,
        out_shape=jax.ShapeDtypeStruct((Mp, N), out_dtype),
        grid=(n_tiles,),
        in_specs=[
            pl.BlockSpec((tm, K), lambda i: (i, 0)),       # activations stream over M
            pl.BlockSpec((K, K), lambda i: (0, 0)),        # weights pinned in VMEM (bf16)
            pl.BlockSpec((1, K), lambda i: (0, 0)),
            pl.BlockSpec((K, N), lambda i: (0, 0)),
            pl.BlockSpec((1, N), lambda i: (0, 0)),
        ],
        out_specs=pl.BlockSpec((tm, N), lambda i: (i, 0)),
        compiler_params=pltpu.CompilerParams(
            dimension_semantics=("parallel",),             # M tiles are independent
            vmem_limit_bytes=vmem_limit,
        ),
        cost_estimate=cost,
    )(x2, w1t, b1, w2t, b2)

    if Mp != M:
        out = out[:M]
    return out.reshape(x.shape[:-1] + (N,))


# ----------------------------------------------------------------------------
# Parameter init (torch nn.Linear default: U(-1/sqrt(fan_in), 1/sqrt(fan_in)))
# Weights are pre-transposed and cast to bf16 ONCE here; no per-forward
# transpose or astype HLOs.  Biases stay f32.
# ----------------------------------------------------------------------------
def init_fc_params(key, input_dim, output_dim, weight_dtype=jnp.bfloat16):
    k1, k2, k3, k4 = jax.random.split(key, 4)
    s = 1.0 / (input_dim ** 0.5)
    w1 = jax.random.uniform(k1, (input_dim, input_dim), jnp.float32, -s, s)   # torch layout (out, in)
    b1 = jax.random.uniform(k2, (input_dim,), jnp.float32, -s, s)
    w2 = jax.random.uniform(k3, (output_dim, input_dim), jnp.float32, -s, s)
    b2 = jax.random.uniform(k4, (output_dim,), jnp.float32, -s, s)
    return {"w1t": jnp.transpose(w1).astype(weight_dtype),
            "b1": b1.reshape(1, input_dim),
            "w2t": jnp.transpose(w2).astype(weight_dtype),
            "b2": b2.reshape(1, output_dim)}


# ----------------------------------------------------------------------------
# Demo / self-check
# ----------------------------------------------------------------------------
if __name__ == "__main__":
    key = jax.random.PRNGKey(0)
    B, T = 4, 64                       # M = 256 rows -> tm = 128, grid = (2,)
    INPUT_DIM, OUTPUT_DIM = 128, 128   # lane-aligned -> unmasked full-lane stores

    kp, kx = jax.random.split(key)
    params = init_fc_params(kp, INPUT_DIM, OUTPUT_DIM)
    x = jax.random.normal(kx, (B, T, INPUT_DIM), jnp.float32)

    fwd = jax.jit(fc_forward)
    y = fwd(x, params)
    jax.block_until_ready(y)

    # Pure-JAX reference with the SAME numerics (bf16 operands, f32 accumulation).
    xb = x.astype(jnp.bfloat16)
    h_ref = jnp.dot(xb.reshape(-1, INPUT_DIM), params["w1t"],
                    preferred_element_type=jnp.float32)
    h_ref = jnp.maximum(h_ref + params["b1"], 0.0).astype(jnp.bfloat16)
    y_ref = (jnp.dot(h_ref, params["w2t"], preferred_element_type=jnp.float32)
             + params["b2"]).reshape(B, T, OUTPUT_DIM).astype(x.dtype)

    assert y.shape == (B, T, OUTPUT_DIM)
    assert y.dtype == x.dtype
    assert jnp.allclose(y, y_ref, atol=5e-3, rtol=5e-3), "mismatch vs reference"

    print("KERNEL_OK")
</pallas_src>

<mosaic_0001>
module attributes {stable_mosaic.version = 11 : i64} {
  func.func @_fused_mlp_kernel(%arg0: i32, %arg1: memref<128x128xf32, #tpu.memory_space<vmem>>, %arg2: memref<128x128xbf16, #tpu.memory_space<vmem>>, %arg3: memref<1x128xf32, #tpu.memory_space<vmem>>, %arg4: memref<128x128xbf16, #tpu.memory_space<vmem>>, %arg5: memref<1x128xf32, #tpu.memory_space<vmem>>, %arg6: memref<128x128xf32, #tpu.memory_space<vmem>>) attributes {dimension_semantics = [#tpu.dimension_semantics<parallel>], iteration_bounds = array<i64: 2>, scalar_prefetch = 0 : i64, scratch_operands = 0 : i64, tpu.core_type = #tpu.core_type<tc>, window_params = [{transform_indices = @transform_0, window_bounds = array<i64: 128, 128>}, {pipeline_mode = #tpu.pipeline_mode<synchronous>, transform_indices = @transform_1, window_bounds = array<i64: 128, 128>}, {pipeline_mode = #tpu.pipeline_mode<synchronous>, transform_indices = @transform_2, window_bounds = array<i64: 1, 128>}, {pipeline_mode = #tpu.pipeline_mode<synchronous>, transform_indices = @transform_3, window_bounds = array<i64: 128, 128>}, {pipeline_mode = #tpu.pipeline_mode<synchronous>, transform_indices = @transform_4, window_bounds = array<i64: 1, 128>}, {transform_indices = @transform_5, window_bounds = array<i64: 128, 128>}]} {
    %c0 = arith.constant 0 : index
    %c0_0 = arith.constant 0 : index
    %0 = vector.load %arg1[%c0, %c0_0] : memref<128x128xf32, #tpu.memory_space<vmem>>, vector<128x128xf32>
    %1 = arith.truncf %0 : vector<128x128xf32> to vector<128x128xbf16>
    %c0_1 = arith.constant 0 : index
    %c0_2 = arith.constant 0 : index
    %2 = vector.load %arg2[%c0_1, %c0_2] : memref<128x128xbf16, #tpu.memory_space<vmem>>, vector<128x128xbf16>
    %cst = arith.constant dense<0.000000e+00> : vector<128x128xf32>
    %3 = tpu.matmul %1, %2, %cst {dimension_numbers = #tpu.dot_dimension_numbers<[1], [0], [0], [1], [0, 0, 1, 1], [], []>} : vector<128x128xbf16>, vector<128x128xbf16>, vector<128x128xf32> -> vector<128x128xf32>
    %c0_3 = arith.constant 0 : index
    %c0_4 = arith.constant 0 : index
    %4 = vector.load %arg3[%c0_3, %c0_4] : memref<1x128xf32, #tpu.memory_space<vmem>>, vector<1x128xf32>
    %5 = vector.broadcast %4 : vector<1x128xf32> to vector<128x128xf32>
    %6 = arith.addf %3, %5 : vector<128x128xf32>
    %cst_5 = arith.constant 0.000000e+00 : f32
    %7 = vector.broadcast %cst_5 : f32 to vector<128x128xf32>
    %8 = arith.maximumf %6, %7 : vector<128x128xf32>
    %9 = arith.truncf %8 : vector<128x128xf32> to vector<128x128xbf16>
    %c0_6 = arith.constant 0 : index
    %c0_7 = arith.constant 0 : index
    %10 = vector.load %arg4[%c0_6, %c0_7] : memref<128x128xbf16, #tpu.memory_space<vmem>>, vector<128x128xbf16>
    %cst_8 = arith.constant dense<0.000000e+00> : vector<128x128xf32>
    %11 = tpu.matmul %9, %10, %cst_8 {dimension_numbers = #tpu.dot_dimension_numbers<[1], [0], [0], [1], [0, 0, 1, 1], [], []>} : vector<128x128xbf16>, vector<128x128xbf16>, vector<128x128xf32> -> vector<128x128xf32>
    %c0_9 = arith.constant 0 : index
    %c0_10 = arith.constant 0 : index
    %12 = vector.load %arg5[%c0_9, %c0_10] : memref<1x128xf32, #tpu.memory_space<vmem>>, vector<1x128xf32>
    %13 = vector.broadcast %12 : vector<1x128xf32> to vector<128x128xf32>
    %14 = arith.addf %11, %13 : vector<128x128xf32>
    %c0_11 = arith.constant 0 : index
    %c0_12 = arith.constant 0 : index
    %15 = vector.load %arg6[%c0_11, %c0_12] : memref<128x128xf32, #tpu.memory_space<vmem>>, vector<128x128xf32>
    tpu.vector_store %arg6[%c0_11, %c0_12], %14 {strides = array<i32>} : memref<128x128xf32, #tpu.memory_space<vmem>>, vector<128x128xf32>,
    return
  }
  func.func @transform_0(%arg0: i32) -> (i32, i32) {
    %c0_i32 = arith.constant 0 : i32
    %c0_i32_0 = arith.constant 0 : i32
    return %arg0, %c0_i32 : i32, i32
  }
  func.func @transform_1(%arg0: i32) -> (i32, i32) {
    %c0_i32 = arith.constant 0 : i32
    %c0_i32_0 = arith.constant 0 : i32
    %c0_i32_1 = arith.constant 0 : i32
    return %c0_i32, %c0_i32_0 : i32, i32
  }
  func.func @transform_2(%arg0: i32) -> (i32, i32) {
    %c0_i32 = arith.constant 0 : i32
    %c0_i32_0 = arith.constant 0 : i32
    %c0_i32_1 = arith.constant 0 : i32
    return %c0_i32, %c0_i32_0 : i32, i32
  }
  func.func @transform_3(%arg0: i32) -> (i32, i32) {
    %c0_i32 = arith.constant 0 : i32
    %c0_i32_0 = arith.constant 0 : i32
    %c0_i32_1 = arith.constant 0 : i32
    return %c0_i32, %c0_i32_0 : i32, i32
  }
  func.func @transform_4(%arg0: i32) -> (i32, i32) {
    %c0_i32 = arith.constant 0 : i32
    %c0_i32_0 = arith.constant 0 : i32
    %c0_i32_1 = arith.constant 0 : i32
    return %c0_i32, %c0_i32_0 : i32, i32
  }
  func.func @transform_5(%arg0: i32) -> (i32, i32) {
    %c0_i32 = arith.constant 0 : i32
    %c0_i32_0 = arith.constant 0 : i32
    return %arg0, %c0_i32 : i32, i32
  }
}

</mosaic_0001>

<llo_original>
// kernel: fc_forward.1
$region0: #{fc_forward.1}
  #allocation0 [shape = 'u32[]', space=smem, size = 0x4, offset = 0x4, fixed_abs, tag = 'smem constant byte address 0x4 - core index']
  #allocation1 [shape = 'u32[144,128]{1,0:T(1,128)}', space=vmem, size = 0x12000, scoped, tag = 'internal scratch']
  %s0 = inlined_call_operand.hbm [shape: f32[256,128], index: 0, kind: input, shape index: {}]
  %s1 = inlined_call_operand.hbm [shape: bf16[128,128], index: 1, kind: input, shape index: {}]
  %s2 = inlined_call_operand.vmem [shape: f32[1,128], index: 2, kind: input, shape index: {}]
  %s3 = inlined_call_operand.hbm [shape: bf16[128,128], index: 3, kind: input, shape index: {}]
  %s4 = inlined_call_operand.vmem [shape: f32[1,128], index: 4, kind: input, shape index: {}]
  %s5 = inlined_call_operand.hbm [shape: f32[256,128], index: 5, kind: output, shape index: {}]
  %s6 = sld [smem:[#allocation0]]
  $region65: #{fc_forward.1} parent=0
    _
  %s8 = ssub.s32 1, %s6
  %s9 = scalar_select 0, %s8, %s6
  $region1: #{fc_forward.1} parent=0
    #allocation2 [shape = 'u8[131072]{0}', space=vmem, size = 0x20000, scoped, tag = 'input window, operand 0']
    #allocation3 [shape = 's32[2]{0}', space=sflag, size = 0x8, scoped, tag = 'scoped memory for fc_forward.1']
    #allocation4 [shape = 's32[2]{0}', space=sflag, size = 0x8, scoped, tag = 'scoped memory for fc_forward.1']
    #allocation5 [shape = 'u8[32768]{0}', space=vmem, size = 0x8000, scoped, tag = 'input window, operand 1, single buffered']
    #allocation6 [shape = 's32[1]{0}', space=sflag, size = 0x4, scoped, tag = 'scoped memory for fc_forward.1']
    #allocation7 [shape = 'u8[32768]{0}', space=vmem, size = 0x8000, scoped, tag = 'input window, operand 3, single buffered']
    #allocation8 [shape = 'u8[131072]{0}', space=vmem, size = 0x20000, scoped, tag = 'output window, operand 0']
    %10 = vsyncpa [#allocation3], 0
    %s11 = scalar_lea.sflag [#allocation3], 1
    %12 = vsyncpa %s11, 0
    %13 = vsyncpa [#allocation6], 0
    %14 = vsyncpa [#allocation4], 0
    %s15 = scalar_lea.sflag [#allocation4], 1
    %16 = vsyncpa %s15, 0
    loop: start=0, step=1, limit=4
    $region2: #{fc_forward.1} parent=1 // loop_pre_header
      _
    $region3: #{fc_forward.1} parent=1 // loop_header
      %s18 = sphi 0, %s22
      %p19 = scmp.ge.s32.totalorder %s18, 4
      %s28 = sphi 0, %s30
      %s31 = sphi 0, %s28
      %s32 = sphi 0, %s31
      %s48 = sphi 0, %s32
      %s52 = sphi 0, %s52
      %s54 = sphi 0, %s52
      %s55 = sphi 0, %s54
      %s69 = sphi 0, %s55
      %s73 = sphi 0, %s73
      %s75 = sphi 0, %s73
      %s76 = sphi 0, %s75
      %s90 = sphi 0, %s76
      %s94 = sphi 0, %s94
      %s96 = sphi 0, %s94
      %s97 = sphi 0, %s96
      %s111 = sphi 0, %s97
      %s115 = sphi 0, %s115
      %s117 = sphi 0, %s115
      %s118 = sphi 0, %s117
      %s132 = sphi 0, %s118
      %s138 = sphi 0, %s140
      %s141 = sphi 0, %s138
      %s142 = sphi 0, %s141
      %s158 = sphi 0, %s142
    $region4: #{fc_forward.1} parent=1 // loop_header_branch
      %21 = sbr.rel (%p19) target = $region8
    $region5: #{fc_forward.1} parent=1 // loop_body
      %s23 = ssub.s32 %s18, 1
      %s24 = ssub.s32 %s18, 2
      %s25 = sadd.s32 %s18, 1
      %s26 = ssub.s32 %s18, %s25
      %p27 = scmp.eq.s32.totalorder %s26, 0
      %s29 = sadd.s32 %s28, 1
      %s30 = scalar_select %p27, %s28, %s29
      %p33 = pneg %p27
      %p34 = scmp.eq.s32.totalorder %s18, 1
      %p35 = por %p33, %p34
      %p36 = scmp.ne.s32.totalorder %s28, %s31
      %p37 = scmp.eq.s32.totalorder %s18, 0
      %p38 = por %p36, %p37
      %p39 = scmp.ne.s32.totalorder %s28, %s31
      %p40 = scmp.eq.s32.totalorder %s23, 1
      %p41 = por %p39, %p40
      %p42 = scmp.ne.s32.totalorder %s31, %s32
      %p43 = scmp.eq.s32.totalorder %s23, 0
      %p44 = por %p42, %p43
      %p45 = scmp.ne.s32.totalorder %s31, %s32
      %p46 = scmp.eq.s32.totalorder %s24, 1
      %p47 = por %p45, %p46
      %p49 = scmp.ne.s32.totalorder %s32, %s48
      %p50 = scmp.eq.s32.totalorder %s24, 0
      %p51 = por %p49, %p50
      %s53 = sadd.s32 %s52, 1
      %p56 = scmp.eq.s32.totalorder %s18, 1
      %p57 = scmp.ne.s32.totalorder %s52, %s54
      %p58 = scmp.eq.s32.totalorder %s18, 0
      %p59 = por %p57, %p58
      %p60 = scmp.ne.s32.totalorder %s52, %s54
      %p61 = scmp.eq.s32.totalorder %s23, 1
      %p62 = por %p60, %p61
      %p63 = scmp.ne.s32.totalorder %s54, %s55
      %p64 = scmp.eq.s32.totalorder %s23, 0
      %p65 = por %p63, %p64
      %p66 = scmp.ne.s32.totalorder %s54, %s55
      %p67 = scmp.eq.s32.totalorder %s24, 1
      %p68 = por %p66, %p67
      %p70 = scmp.ne.s32.totalorder %s55, %s69
      %p71 = scmp.eq.s32.totalorder %s24, 0
      %p72 = por %p70, %p71
      %s74 = sadd.s32 %s73, 1
      %p77 = scmp.eq.s32.totalorder %s18, 1
      %p78 = scmp.ne.s32.totalorder %s73, %s75
      %p79 = scmp.eq.s32.totalorder %s18, 0
      %p80 = por %p78, %p79
      %p81 = scmp.ne.s32.totalorder %s73, %s75
      %p82 = scmp.eq.s32.totalorder %s23, 1
      %p83 = por %p81, %p82
      %p84 = scmp.ne.s32.totalorder %s75, %s76
      %p85 = scmp.eq.s32.totalorder %s23, 0
      %p86 = por %p84, %p85
      %p87 = scmp.ne.s32.totalorder %s75, %s76
      %p88 = scmp.eq.s32.totalorder %s24, 1
      %p89 = por %p87, %p88
      %p91 = scmp.ne.s32.totalorder %s76, %s90
      %p92 = scmp.eq.s32.totalorder %s24, 0
      %p93 = por %p91, %p92
      %s95 = sadd.s32 %s94, 1
      %p98 = scmp.eq.s32.totalorder %s18, 1
      %p99 = scmp.ne.s32.totalorder %s94, %s96
      %p100 = scmp.eq.s32.totalorder %s18, 0
      %p101 = por %p99, %p100
      %p102 = scmp.ne.s32.totalorder %s94, %s96
      %p103 = scmp.eq.s32.totalorder %s23, 1
      %p104 = por %p102, %p103
      %p105 = scmp.ne.s32.totalorder %s96, %s97
      %p106 = scmp.eq.s32.totalorder %s23, 0
      %p107 = por %p105, %p106
      %p108 = scmp.ne.s32.totalorder %s96, %s97
      %p109 = scmp.eq.s32.totalorder %s24, 1
      %p110 = por %p108, %p109
      %p112 = scmp.ne.s32.totalorder %s97, %s111
      %p113 = scmp.eq.s32.totalorder %s24, 0
      %p114 = por %p112, %p113
      %s116 = sadd.s32 %s115, 1
      %p119 = scmp.eq.s32.totalorder %s18, 1
      %p120 = scmp.ne.s32.totalorder %s115, %s117
      %p121 = scmp.eq.s32.totalorder %s18, 0
      %p122 = por %p120, %p121
      %p123 = scmp.ne.s32.totalorder %s115, %s117
      %p124 = scmp.eq.s32.totalorder %s23, 1
      %p125 = por %p123, %p124
      %p126 = scmp.ne.s32.totalorder %s117, %s118
      %p127 = scmp.eq.s32.totalorder %s23, 0
      %p128 = por %p126, %p127
      %p129 = scmp.ne.s32.totalorder %s117, %s118
      %p130 = scmp.eq.s32.totalorder %s24, 1
      %p131 = por %p129, %p130
      %p133 = scmp.ne.s32.totalorder %s118, %s132
      %p134 = scmp.eq.s32.totalorder %s24, 0
      %p135 = por %p133, %p134
      %s136 = ssub.s32 %s18, %s25
      %p137 = scmp.eq.s32.totalorder %s136, 0
      %s139 = sadd.s32 %s138, 1
      %s140 = scalar_select %p137, %s138, %s139
      %p143 = pneg %p137
      %p144 = scmp.eq.s32.totalorder %s18, 1
      %p145 = por %p143, %p144
      %p146 = scmp.ne.s32.totalorder %s138, %s141
      %p147 = scmp.eq.s32.totalorder %s18, 0
      %p148 = por %p146, %p147
      %p149 = scmp.ne.s32.totalorder %s138, %s141
      %p150 = scmp.eq.s32.totalorder %s23, 1
      %p151 = por %p149, %p150
      %p152 = scmp.ne.s32.totalorder %s141, %s142
      %p153 = scmp.eq.s32.totalorder %s23, 0
      %p154 = por %p152, %p153
      %p155 = scmp.ne.s32.totalorder %s141, %s142
      %p156 = scmp.eq.s32.totalorder %s24, 1
      %p157 = por %p155, %p156
      %p159 = scmp.ne.s32.totalorder %s142, %s158
      %p160 = scmp.eq.s32.totalorder %s24, 0
      %p161 = por %p159, %p160
      %p162 = scmp.le.s32.totalorder 1, %s18
      %p163 = scmp.lt.s32.totalorder %s18, 3
      %p164 = pnand %p162, %p163
      %p165 = pneg %p164
      // Predicated region
      $region9: #{fc_forward.1} parent=5 // pred_check
        _
      $region10: #{fc_forward.1} parent=5 // pred_check_branch
        %167 = sbr.rel (%p164) target = $region12
      $region11: #{fc_forward.1} parent=5 // pred_region
        %s168 = ssub.s32 %s18, 1
        // Predicated region
        $region13: #{fc_forward.1} parent=11 // pred_check
          %p169 = pneg %p65
        $region14: #{fc_forward.1} parent=11 // pred_check_branch
          %171 = sbr.rel (%p169) target = $region16
        $region15: #{fc_forward.1} parent=11 // pred_region
          %s173 = ssub.s32 1024, 1024
          %174 = vsyncadd [#allocation6], %s173
          %s175 = sshll.u32 [#allocation5], 4
          %s176 = int_to_ptr.vmem [resolvable:$true] %s175
          %181 = dma.hbm_to_vmem [thread:$0]  %s1, 1024, %s176, [#allocation6], 64, 64, 4
        $region16: #{fc_forward.1} parent=11 // pred_fallthru
          _
        // Predicated region
        $region17: #{fc_forward.1} parent=11 // pred_check
          %p182 = pneg %p86
        $region18: #{fc_forward.1} parent=11 // pred_check_branch
          %184 = sbr.rel (%p182) target = $region20
        $region19: #{fc_forward.1} parent=11 // pred_region
          _
        $region20: #{fc_forward.1} parent=11 // pred_fallthru
          _
        // Predicated region
        $region21: #{fc_forward.1} parent=11 // pred_check
          %p185 = pneg %p107
        $region22: #{fc_forward.1} parent=11 // pred_check_branch
          %187 = sbr.rel (%p185) target = $region24
        $region23: #{fc_forward.1} parent=11 // pred_region
          %s189 = ssub.s32 1024, 1024
          %190 = vsyncadd [#allocation6], %s189
          %s191 = sshll.u32 [#allocation7], 4
          %s192 = int_to_ptr.vmem [resolvable:$true] %s191
          %197 = dma.hbm_to_vmem [thread:$0]  %s3, 1024, %s192, [#allocation6], 64, 64, 4
        $region24: #{fc_forward.1} parent=11 // pred_fallthru
          _
        // Predicated region
        $region25: #{fc_forward.1} parent=11 // pred_check
          %p198 = pneg %p128
        $region26: #{fc_forward.1} parent=11 // pred_check_branch
          %200 = sbr.rel (%p198) target = $region28
        $region27: #{fc_forward.1} parent=11 // pred_region
          _
        $region28: #{fc_forward.1} parent=11 // pred_fallthru
          _
      $region12: #{fc_forward.1} parent=5 // pred_fallthru
        _
      %p201 = scmp.lt.s32.totalorder %s18, 2
      // Predicated region
      $region29: #{fc_forward.1} parent=5 // pred_check
        %p202 = pneg %p201
      $region30: #{fc_forward.1} parent=5 // pred_check_branch
        %204 = sbr.rel (%p202) target = $region32
      $region31: #{fc_forward.1} parent=5 // pred_region
        // Predicated region
        $region33: #{fc_forward.1} parent=31 // pred_check
          %p205 = pneg %p38
        $region34: #{fc_forward.1} parent=31 // pred_check_branch
          %207 = sbr.rel (%p205) target = $region36
        $region35: #{fc_forward.1} parent=31 // pred_region
          %s208 = sand.u32 %s28, 1
          %s209 = scalar_lea.sflag [#allocation3], %s208
          %s210 = sand.u32 %s28, 1
          %s211 = smul.addr %s210, 128
          %s212 = scalar_lea.vmem [#allocation2], %s211
          %s213 = smul.u32 16, %s18
          %s215 = ssub.s32 2048, 2048
          %216 = vsyncadd %s209, %s215
          %s217 = smul.addr %s213, 128
          %s218 = scalar_lea.hbm %s0, %s217
          %s219 = sshll.u32 %s212, 4
          %s220 = int_to_ptr.vmem [resolvable:$true] %s219
          %225 = dma.hbm_to_vmem [thread:$0]  %s218, 2048, %s220, %s209, 128, 128, 8
        $region36: #{fc_forward.1} parent=31 // pred_fallthru
          _
      $region32: #{fc_forward.1} parent=5 // pred_fallthru
        _
      %p226 = scmp.le.s32.totalorder 1, %s18
      %p227 = scmp.lt.s32.totalorder %s18, 3
      %p228 = pnand %p226, %p227
      %p229 = pneg %p228
      // Predicated region
      $region37: #{fc_forward.1} parent=5 // pred_check
        _
      $region38: #{fc_forward.1} parent=5 // pred_check_branch
        %231 = sbr.rel (%p228) target = $region40
      $region39: #{fc_forward.1} parent=5 // pred_region
        %s232 = ssub.s32 %s18, 1
        %s233 = sand.u32 %s31, 1
        %s234 = scalar_lea.sflag [#allocation3], %s233
        %s235 = sand.u32 %s31, 1
        %s236 = smul.addr %s235, 128
        %s237 = scalar_lea.vmem [#allocation2], %s236
        // Predicated region
        $region41: #{fc_forward.1} parent=39 // pred_check
          %p238 = pneg %p44
        $region42: #{fc_forward.1} parent=39 // pred_check_branch
          %240 = sbr.rel (%p238) target = $region44
        $region43: #{fc_forward.1} parent=39 // pred_region
          %241 = dma.done %s234, 2048
        $region44: #{fc_forward.1} parent=39 // pred_fallthru
          _
        // Predicated region
        $region45: #{fc_forward.1} parent=39 // pred_check
          %p242 = pneg %p65
        $region46: #{fc_forward.1} parent=39 // pred_check_branch
          %244 = sbr.rel (%p242) target = $region48
        $region47: #{fc_forward.1} parent=39 // pred_region
          %245 = dma.done [#allocation6], 1024
        $region48: #{fc_forward.1} parent=39 // pred_fallthru
          _
        // Predicated region
        $region49: #{fc_forward.1} parent=39 // pred_check
          %p246 = pneg %p107
        $region50: #{fc_forward.1} parent=39 // pred_check_branch
          %248 = sbr.rel (%p246) target = $region52
        $region51: #{fc_forward.1} parent=39 // pred_region
          %249 = dma.done [#allocation6], 1024
        $region52: #{fc_forward.1} parent=39 // pred_fallthru
          _
        %s250 = sand.u32 %s31, 1
        %s251 = scalar_lea.sflag [#allocation3], %s250
        %s252 = sand.u32 %s31, 1
        %s253 = smul.addr %s252, 128
        %s254 = scalar_lea.vmem [#allocation2], %s253
        %p255 = pneg %p44
        %p256 = pneg %p41
        %p257 = pneg %p65
        %p258 = pneg %p62
        %p259 = pneg %p86
        %p260 = pneg %p83
        %p261 = pneg %p107
        %p262 = pneg %p104
        %p263 = pneg %p128
        %p264 = pneg %p125
        %p265 = pneg %p154
        %p266 = pneg %p151
        %s267 = sand.u32 %s141, 1
        %s268 = scalar_lea.sflag [#allocation4], %s267
        %s269 = sand.u32 %s141, 1
        %s270 = smul.addr %s269, 128
        %s271 = scalar_lea.vmem [#allocation8], %s270
        %s272 = smul.u32 16, %s23
        %s273 = smul.u32 16, %s23
        %v275 = vld [vmem:[%s237] sm:$0xff]
        %v276 = vld [vmem:[%s237 + $0x8] sm:$0xff]
        %v277 = vld [vmem:[%s237 + $0x10] sm:$0xff]
        %v278 = vld [vmem:[%s237 + $0x18] sm:$0xff]
        %v279 = vld [vmem:[%s237 + $0x20] sm:$0xff]
        %v280 = vld [vmem:[%s237 + $0x28] sm:$0xff]
        %v281 = vld [vmem:[%s237 + $0x30] sm:$0xff]
        %v282 = vld [vmem:[%s237 + $0x38] sm:$0xff]
        %v283 = vld [vmem:[%s237 + $0x40] sm:$0xff]
        %v284 = vld [vmem:[%s237 + $0x48] sm:$0xff]
        %v285 = vld [vmem:[%s237 + $0x50] sm:$0xff]
        %v286 = vld [vmem:[%s237 + $0x58] sm:$0xff]
        %v287 = vld [vmem:[%s237 + $0x60] sm:$0xff]
        %v288 = vld [vmem:[%s237 + $0x68] sm:$0xff]
        %v289 = vld [vmem:[%s237 + $0x70] sm:$0xff]
        %v290 = vld [vmem:[%s237 + $0x78] sm:$0xff]
        %v291 = vpack.c.bf16 %v276, %v275
        %v292 = vpack.c.bf16 %v278, %v277
        %v293 = vpack.c.bf16 %v280, %v279
        %v294 = vpack.c.bf16 %v282, %v281
        %v295 = vpack.c.bf16 %v284, %v283
        %v296 = vpack.c.bf16 %v286, %v285
        %v297 = vpack.c.bf16 %v288, %v287
        %v298 = vpack.c.bf16 %v290, %v289
        %v299 = vld [vmem:[#allocation5] sm:$0xf]
        %v300 = vld [vmem:[#allocation5 + $0x4] sm:$0xf]
        %v301 = vld [vmem:[#allocation5 + $0x8] sm:$0xf]
        %v302 = vld [vmem:[#allocation5 + $0xc] sm:$0xf]
        %v303 = vld [vmem:[#allocation5 + $0x10] sm:$0xf]
        %v304 = vld [vmem:[#allocation5 + $0x14] sm:$0xf]
        %v305 = vld [vmem:[#allocation5 + $0x18] sm:$0xf]
        %v306 = vld [vmem:[#allocation5 + $0x1c] sm:$0xf]
        %v307 = vld [vmem:[#allocation5 + $0x20] sm:$0xf]
        %v308 = vld [vmem:[#allocation5 + $0x24] sm:$0xf]
        %v309 = vld [vmem:[#allocation5 + $0x28] sm:$0xf]
        %v310 = vld [vmem:[#allocation5 + $0x2c] sm:$0xf]
        %v311 = vld [vmem:[#allocation5 + $0x30] sm:$0xf]
        %v312 = vld [vmem:[#allocation5 + $0x34] sm:$0xf]
        %v313 = vld [vmem:[#allocation5 + $0x38] sm:$0xf]
        %v314 = vld [vmem:[#allocation5 + $0x3c] sm:$0xf]
        %v315 = vld [vmem:[%s2] sm:$0x1]
        %v317 = vlaneseq
        %v318 = vshrl.u32 %v317, 7
        %v319 = vsub.s32 0, %v318
        %v320 = vrot.slane %v315, %v319
        %v338 = vunpack.c.l.b16 %v299
        %v339 = vunpack.c.l.b16 %v300
        %v340 = vunpack.c.l.b16 %v301
        %v341 = vunpack.c.l.b16 %v302
        %v342 = vunpack.c.l.b16 %v303
        %v343 = vunpack.c.l.b16 %v304
        %v344 = vunpack.c.l.b16 %v305
        %v345 = vunpack.c.l.b16 %v306
        %v346 = vunpack.c.l.b16 %v307
        %v347 = vunpack.c.l.b16 %v308
        %v348 = vunpack.c.l.b16 %v309
        %v349 = vunpack.c.l.b16 %v310
        %v350 = vunpack.c.l.b16 %v311
        %v351 = vunpack.c.l.b16 %v312
        %v352 = vunpack.c.l.b16 %v313
        %v353 = vunpack.c.l.b16 %v314
        %v354 = vpack.c.b16 %v339, %v338
        %v355 = vpack.c.b16 %v341, %v340
        %v356 = vpack.c.b16 %v343, %v342
        %v357 = vpack.c.b16 %v345, %v344
        %v358 = vpack.c.b16 %v347, %v346
        %v359 = vpack.c.b16 %v349, %v348
        %v360 = vpack.c.b16 %v351, %v350
        %v361 = vpack.c.b16 %v353, %v352
        %370 = vmatprep.subr.bf16.mxu0 0
        %371 = vmatpush1.bf16.msra.mxu0 %v354
        %372 = vmatprep.subr.bf16.mxu0 0
        %373 = vmatpush1.bf16.msra.mxu0 %v355
        %374 = vmatprep.subr.bf16.mxu0 0
        %375 = vmatpush1.bf16.msra.mxu0 %v356
        %376 = vmatprep.subr.bf16.mxu0 0
        %377 = vmatpush1.bf16.msra.mxu0 %v357
        %378 = vmatprep.subr.bf16.mxu0 0
        %379 = vmatpush1.bf16.msra.mxu0 %v358
        %380 = vmatprep.subr.bf16.mxu0 0
        %381 = vmatpush1.bf16.msra.mxu0 %v359
        %382 = vmatprep.subr.bf16.mxu0 0
        %383 = vmatpush1.bf16.msra.mxu0 %v360
        %384 = vmatprep.subr.bf16.mxu0 0
        %385 = vmatpush1.bf16.msra.mxu0 %v361
        %386 = vmatprep.subr.bf16.mxu0 0
        %387 = vmatpush1.bf16.msra.mxu0 0
        %388 = vmatprep.subr.bf16.mxu0 0
        %389 = vmatpush1.bf16.msra.mxu0 0
        %390 = vmatprep.subr.bf16.mxu0 0
        %391 = vmatpush1.bf16.msra.mxu0 0
        %392 = vmatprep.subr.bf16.mxu0 0
        %393 = vmatpush1.bf16.msra.mxu0 0
        %394 = vmatprep.subr.bf16.mxu0 0
        %395 = vmatpush1.bf16.msra.mxu0 0
        %396 = vmatprep.subr.bf16.mxu0 0
        %397 = vmatpush1.bf16.msra.mxu0 0
        %398 = vmatprep.subr.bf16.mxu0 0
        %399 = vmatpush1.bf16.msra.mxu0 0
        %400 = vmatprep.subr.bf16.mxu0 0
        %401 = vmatpush1.bf16.msra.mxu0 0
        %402 = vmatprep.mubr.bf16.mxu0 0
        %403 = vmatmul.mubr.bf16.gmra.mrb[0].mxu0 %v291
        %v404 = vpop.f32.mrb[0].mxu0
        %v405 = vadd.f32 %v320, %v404
        %v406 = vpop.f32.mrb[0].mxu0
        %v407 = vpop.f32.mrb[0].mxu0
        %v408 = vadd.f32 %v320, %v407
        %v409 = vpop.f32.mrb[0].mxu0
        %410 = vmatprep.mubr.bf16.mxu0 0
        %411 = vmatmul.mubr.bf16.gmra.mrb[0].mxu0 %v292
        %v412 = vpop.f32.mrb[0].mxu0
        %v413 = vadd.f32 %v320, %v412
        %v414 = vpop.f32.mrb[0].mxu0
        %v415 = vpop.f32.mrb[0].mxu0
        %v416 = vadd.f32 %v320, %v415
        %v417 = vpop.f32.mrb[0].mxu0
        %418 = vmatprep.mubr.bf16.mxu0 0
        %419 = vmatmul.mubr.bf16.gmra.mrb[0].mxu0 %v293
        %v420 = vpop.f32.mrb[0].mxu0
        %v421 = vadd.f32 %v320, %v420
        %v422 = vpop.f32.mrb[0].mxu0
        %v423 = vpop.f32.mrb[0].mxu0
        %v424 = vadd.f32 %v320, %v423
        %v425 = vpop.f32.mrb[0].mxu0
        %426 = vmatprep.mubr.bf16.mxu0 0
        %427 = vmatmul.mubr.bf16.gmra.mrb[0].mxu0 %v294
        %v428 = vpop.f32.mrb[0].mxu0
        %v429 = vadd.f32 %v320, %v428
        %v430 = vpop.f32.mrb[0].mxu0
        %v431 = vpop.f32.mrb[0].mxu0
        %v432 = vadd.f32 %v320, %v431
        %v433 = vpop.f32.mrb[0].mxu0
        %434 = vmatprep.mubr.bf16.mxu0 0
        %435 = vmatmul.mubr.bf16.gmra.mrb[0].mxu0 %v295
        %v436 = vpop.f32.mrb[0].mxu0
        %v437 = vadd.f32 %v320, %v436
        %v438 = vpop.f32.mrb[0].mxu0
        %v439 = vpop.f32.mrb[0].mxu0
        %v440 = vadd.f32 %v320, %v439
        %v441 = vpop.f32.mrb[0].mxu0
        %442 = vmatprep.mubr.bf16.mxu0 0
        %443 = vmatmul.mubr.bf16.gmra.mrb[0].mxu0 %v296
        %v444 = vpop.f32.mrb[0].mxu0
        %v445 = vadd.f32 %v320, %v444
        %v446 = vpop.f32.mrb[0].mxu0
        %v447 = vpop.f32.mrb[0].mxu0
        %v448 = vadd.f32 %v320, %v447
        %v449 = vpop.f32.mrb[0].mxu0
        %450 = vmatprep.mubr.bf16.mxu0 0
        %451 = vmatmul.mubr.bf16.gmra.mrb[0].mxu0 %v297
        %v452 = vpop.f32.mrb[0].mxu0
        %v453 = vadd.f32 %v320, %v452
        %v454 = vpop.f32.mrb[0].mxu0
        %v455 = vpop.f32.mrb[0].mxu0
        %v456 = vadd.f32 %v320, %v455
        %v457 = vpop.f32.mrb[0].mxu0
        %458 = vmatprep.mubr.bf16.mxu0 0
        %459 = vmatmul.mubr.bf16.gmra.mrb[0].mxu0 %v298
        %v460 = vpop.f32.mrb[0].mxu0
        %v461 = vadd.f32 %v320, %v460
        %v462 = vpop.f32.mrb[0].mxu0
        %v463 = vpop.f32.mrb[0].mxu0
        %v464 = vadd.f32 %v320, %v463
        %v465 = vpop.f32.mrb[0].mxu0
        %466 = vdwg.mxu0
        %v467 = vmax.f32 %v405, 0.0
        %v468 = vmax.f32 %v408, 0.0
        %v469 = vmax.f32 %v413, 0.0
        %v470 = vmax.f32 %v416, 0.0
        %v471 = vmax.f32 %v421, 0.0
        %v472 = vmax.f32 %v424, 0.0
        %v473 = vmax.f32 %v429, 0.0
        %v474 = vmax.f32 %v432, 0.0
        %v475 = vmax.f32 %v437, 0.0
        %v476 = vmax.f32 %v440, 0.0
        %v477 = vmax.f32 %v445, 0.0
        %v478 = vmax.f32 %v448, 0.0
        %v479 = vmax.f32 %v453, 0.0
        %v480 = vmax.f32 %v456, 0.0
        %v481 = vmax.f32 %v461, 0.0
        %v482 = vmax.f32 %v464, 0.0
        %v483 = vpack.c.bf16 %v468, %v467
        %v484 = vpack.c.bf16 %v470, %v469
        %v485 = vpack.c.bf16 %v472, %v471
        %v486 = vpack.c.bf16 %v474, %v473
        %v487 = vpack.c.bf16 %v476, %v475
        %v488 = vpack.c.bf16 %v478, %v477
        %v489 = vpack.c.bf16 %v480, %v479
        %v490 = vpack.c.bf16 %v482, %v481
        %v491 = vld [vmem:[#allocation7] sm:$0xf]
        %v492 = vld [vmem:[#allocation7 + $0x4] sm:$0xf]
        %v493 = vld [vmem:[#allocation7 + $0x8] sm:$0xf]
        %v494 = vld [vmem:[#allocation7 + $0xc] sm:$0xf]
        %v495 = vld [vmem:[#allocation7 + $0x10] sm:$0xf]
        %v496 = vld [vmem:[#allocation7 + $0x14] sm:$0xf]
        %v497 = vld [vmem:[#allocation7 + $0x18] sm:$0xf]
        %v498 = vld [vmem:[#allocation7 + $0x1c] sm:$0xf]
        %v499 = vld [vmem:[#allocation7 + $0x20] sm:$0xf]
        %v500 = vld [vmem:[#allocation7 + $0x24] sm:$0xf]
        %v501 = vld [vmem:[#allocation7 + $0x28] sm:$0xf]
        %v502 = vld [vmem:[#allocation7 + $0x2c] sm:$0xf]
        %v503 = vld [vmem:[#allocation7 + $0x30] sm:$0xf]
        %v504 = vld [vmem:[#allocation7 + $0x34] sm:$0xf]
        %v505 = vld [vmem:[#allocation7 + $0x38] sm:$0xf]
        %v506 = vld [vmem:[#allocation7 + $0x3c] sm:$0xf]
        %v507 = vld [vmem:[%s4] sm:$0x1]
        %v509 = vlaneseq
        %v510 = vshrl.u32 %v509, 7
        %v511 = vsub.s32 0, %v510
        %v512 = vrot.slane %v507, %v511
        %v530 = vunpack.c.l.b16 %v491
        %v531 = vunpack.c.l.b16 %v492
        %v532 = vunpack.c.l.b16 %v493
        %v533 = vunpack.c.l.b16 %v494
        %v534 = vunpack.c.l.b16 %v495
        %v535 = vunpack.c.l.b16 %v496
        %v536 = vunpack.c.l.b16 %v497
        %v537 = vunpack.c.l.b16 %v498
        %v538 = vunpack.c.l.b16 %v499
        %v539 = vunpack.c.l.b16 %v500
        %v540 = vunpack.c.l.b16 %v501
        %v541 = vunpack.c.l.b16 %v502
        %v542 = vunpack.c.l.b16 %v503
        %v543 = vunpack.c.l.b16 %v504
        %v544 = vunpack.c.l.b16 %v505
        %v545 = vunpack.c.l.b16 %v506
        %v546 = vpack.c.b16 %v531, %v530
        %v547 = vpack.c.b16 %v533, %v532
        %v548 = vpack.c.b16 %v535, %v534
        %v549 = vpack.c.b16 %v537, %v536
        %v550 = vpack.c.b16 %v539, %v538
        %v551 = vpack.c.b16 %v541, %v540
        %v552 = vpack.c.b16 %v543, %v542
        %v553 = vpack.c.b16 %v545, %v544
        %562 = vmatprep.subr.bf16.mxu0 0
        %563 = vmatpush1.bf16.msra.mxu0 %v546
        %564 = vmatprep.subr.bf16.mxu0 0
        %565 = vmatpush1.bf16.msra.mxu0 %v547
        %566 = vmatprep.subr.bf16.mxu0 0
        %567 = vmatpush1.bf16.msra.mxu0 %v548
        %568 = vmatprep.subr.bf16.mxu0 0
        %569 = vmatpush1.bf16.msra.mxu0 %v549
        %570 = vmatprep.subr.bf16.mxu0 0
        %571 = vmatpush1.bf16.msra.mxu0 %v550
        %572 = vmatprep.subr.bf16.mxu0 0
        %573 = vmatpush1.bf16.msra.mxu0 %v551
        %574 = vmatprep.subr.bf16.mxu0 0
        %575 = vmatpush1.bf16.msra.mxu0 %v552
        %576 = vmatprep.subr.bf16.mxu0 0
        %577 = vmatpush1.bf16.msra.mxu0 %v553
        %578 = vmatprep.subr.bf16.mxu0 0
        %579 = vmatpush1.bf16.msra.mxu0 0
        %580 = vmatprep.subr.bf16.mxu0 0
        %581 = vmatpush1.bf16.msra.mxu0 0
        %582 = vmatprep.subr.bf16.mxu0 0
        %583 = vmatpush1.bf16.msra.mxu0 0
        %584 = vmatprep.subr.bf16.mxu0 0
        %585 = vmatpush1.bf16.msra.mxu0 0
        %586 = vmatprep.subr.bf16.mxu0 0
        %587 = vmatpush1.bf16.msra.mxu0 0
        %588 = vmatprep.subr.bf16.mxu0 0
        %589 = vmatpush1.bf16.msra.mxu0 0
        %590 = vmatprep.subr.bf16.mxu0 0
        %591 = vmatpush1.bf16.msra.mxu0 0
        %592 = vmatprep.subr.bf16.mxu0 0
        %593 = vmatpush1.bf16.msra.mxu0 0
        %594 = vmatprep.mubr.bf16.mxu0 0
        %595 = vmatmul.mubr.bf16.gmra.mrb[0].mxu0 %v483
        %v596 = vpop.f32.mrb[0].mxu0
        %v597 = vadd.f32 %v512, %v596
        %v598 = vpop.f32.mrb[0].mxu0
        %v599 = vpop.f32.mrb[0].mxu0
        %v600 = vadd.f32 %v512, %v599
        %v601 = vpop.f32.mrb[0].mxu0
        %602 = vmatprep.mubr.bf16.mxu0 0
        %603 = vmatmul.mubr.bf16.gmra.mrb[0].mxu0 %v484
        %v604 = vpop.f32.mrb[0].mxu0
        %v605 = vadd.f32 %v512, %v604
        %v606 = vpop.f32.mrb[0].mxu0
        %v607 = vpop.f32.mrb[0].mxu0
        %v608 = vadd.f32 %v512, %v607
        %v609 = vpop.f32.mrb[0].mxu0
        %610 = vmatprep.mubr.bf16.mxu0 0
        %611 = vmatmul.mubr.bf16.gmra.mrb[0].mxu0 %v485
        %v612 = vpop.f32.mrb[0].mxu0
        %v613 = vadd.f32 %v512, %v612
        %v614 = vpop.f32.mrb[0].mxu0
        %v615 = vpop.f32.mrb[0].mxu0
        %v616 = vadd.f32 %v512, %v615
        %v617 = vpop.f32.mrb[0].mxu0
        %618 = vmatprep.mubr.bf16.mxu0 0
        %619 = vmatmul.mubr.bf16.gmra.mrb[0].mxu0 %v486
        %v620 = vpop.f32.mrb[0].mxu0
        %v621 = vadd.f32 %v512, %v620
        %v622 = vpop.f32.mrb[0].mxu0
        %v623 = vpop.f32.mrb[0].mxu0
        %v624 = vadd.f32 %v512, %v623
        %v625 = vpop.f32.mrb[0].mxu0
        %626 = vmatprep.mubr.bf16.mxu0 0
        %627 = vmatmul.mubr.bf16.gmra.mrb[0].mxu0 %v487
        %v628 = vpop.f32.mrb[0].mxu0
        %v629 = vadd.f32 %v512, %v628
        %v630 = vpop.f32.mrb[0].mxu0
        %v631 = vpop.f32.mrb[0].mxu0
        %v632 = vadd.f32 %v512, %v631
        %v633 = vpop.f32.mrb[0].mxu0
        %634 = vmatprep.mubr.bf16.mxu0 0
        %635 = vmatmul.mubr.bf16.gmra.mrb[0].mxu0 %v488
        %v636 = vpop.f32.mrb[0].mxu0
        %v637 = vadd.f32 %v512, %v636
        %v638 = vpop.f32.mrb[0].mxu0
        %v639 = vpop.f32.mrb[0].mxu0
        %v640 = vadd.f32 %v512, %v639
        %v641 = vpop.f32.mrb[0].mxu0
        %642 = vmatprep.mubr.bf16.mxu0 0
        %643 = vmatmul.mubr.bf16.gmra.mrb[0].mxu0 %v489
        %v644 = vpop.f32.mrb[0].mxu0
        %v645 = vadd.f32 %v512, %v644
        %v646 = vpop.f32.mrb[0].mxu0
        %v647 = vpop.f32.mrb[0].mxu0
        %v648 = vadd.f32 %v512, %v647
        %v649 = vpop.f32.mrb[0].mxu0
        %650 = vmatprep.mubr.bf16.mxu0 0
        %651 = vmatmul.mubr.bf16.gmra.mrb[0].mxu0 %v490
        %v652 = vpop.f32.mrb[0].mxu0
        %v653 = vadd.f32 %v512, %v652
        %v654 = vpop.f32.mrb[0].mxu0
        %v655 = vpop.f32.mrb[0].mxu0
        %v656 = vadd.f32 %v512, %v655
        %v657 = vpop.f32.mrb[0].mxu0
        %658 = vdwg.mxu0
        %659 = vst [vmem:[%s271] sm:$0xff] %v597
        %660 = vst [vmem:[%s271 + $0x8] sm:$0xff] %v600
        %661 = vst [vmem:[%s271 + $0x10] sm:$0xff] %v605
        %662 = vst [vmem:[%s271 + $0x18] sm:$0xff] %v608
        %663 = vst [vmem:[%s271 + $0x20] sm:$0xff] %v613
        %664 = vst [vmem:[%s271 + $0x28] sm:$0xff] %v616
        %665 = vst [vmem:[%s271 + $0x30] sm:$0xff] %v621
        %666 = vst [vmem:[%s271 + $0x38] sm:$0xff] %v624
        %667 = vst [vmem:[%s271 + $0x40] sm:$0xff] %v629
        %668 = vst [vmem:[%s271 + $0x48] sm:$0xff] %v632
        %669 = vst [vmem:[%s271 + $0x50] sm:$0xff] %v637
        %670 = vst [vmem:[%s271 + $0x58] sm:$0xff] %v640
        %671 = vst [vmem:[%s271 + $0x60] sm:$0xff] %v645
        %672 = vst [vmem:[%s271 + $0x68] sm:$0xff] %v648
        %673 = vst [vmem:[%s271 + $0x70] sm:$0xff] %v653
        %674 = vst [vmem:[%s271 + $0x78] sm:$0xff] %v656
        %s675 = sand.u32 %s141, 1
        %s676 = scalar_lea.sflag [#allocation4], %s675
        %s677 = sand.u32 %s141, 1
        %s678 = smul.addr %s677, 128
        %s679 = scalar_lea.vmem [#allocation8], %s678
        // Predicated region
        $region53: #{fc_forward.1} parent=39 // pred_check
          %p680 = pneg %p151
        $region54: #{fc_forward.1} parent=39 // pred_check_branch
          %682 = sbr.rel (%p680) target = $region56
        $region55: #{fc_forward.1} parent=39 // pred_region
          %s683 = smul.u32 16, %s23
          %s685 = ssub.s32 2048, 2048
          %686 = vsyncadd %s676, %s685
          %s687 = smul.addr %s683, 128
          %s688 = scalar_lea.hbm %s5, %s687
          %s689 = sshll.u32 %s679, 4
          %s690 = int_to_ptr.vmem [resolvable:$true] %s689
          %695 = dma.vmem_to_hbm [thread:$0]  %s690, 2048, %s688, %s676, 128, 128, 8
        $region56: #{fc_forward.1} parent=39 // pred_fallthru
          _
      $region40: #{fc_forward.1} parent=5 // pred_fallthru
        _
      %p696 = scmp.le.s32.totalorder 2, %s18
      // Predicated region
      $region57: #{fc_forward.1} parent=5 // pred_check
        %p697 = pneg %p696
      $region58: #{fc_forward.1} parent=5 // pred_check_branch
        %699 = sbr.rel (%p697) target = $region60
      $region59: #{fc_forward.1} parent=5 // pred_region
        %s700 = ssub.s32 %s18, 2
        // Predicated region
        $region61: #{fc_forward.1} parent=59 // pred_check
          %p701 = pneg %p157
        $region62: #{fc_forward.1} parent=59 // pred_check_branch
          %703 = sbr.rel (%p701) target = $region64
        $region63: #{fc_forward.1} parent=59 // pred_region
          %s704 = sand.u32 %s142, 1
          %s705 = scalar_lea.sflag [#allocation4], %s704
          %s706 = sand.u32 %s142, 1
          %s707 = smul.addr %s706, 128
          %s708 = scalar_lea.vmem [#allocation8], %s707
          %709 = dma.done %s705, 2048
        $region64: #{fc_forward.1} parent=59 // pred_fallthru
          _
      $region60: #{fc_forward.1} parent=5 // pred_fallthru
        _
    $region6: #{fc_forward.1} parent=1 // loop_footer
      %s22 = sadd.s32 1, %s18
    $region7: #{fc_forward.1} parent=1 // loop_footer_branch
      %17 = sbr.rel target = $region3
    $region8: #{fc_forward.1} parent=1 // loop_exit
      _
    %710 = vsyncpa [#allocation3], 1
    %s711 = scalar_lea.sflag [#allocation3], 1
    %712 = vsyncpa %s711, 1
    %713 = vsyncpa [#allocation6], 1
    %714 = vsyncpa [#allocation4], 1
    %s715 = scalar_lea.sflag [#allocation4], 1
    %716 = vsyncpa %s715, 1

</llo_original>
